<compile_context>
chip_gen: v6e
topology: v6e:2x2x1
jax: 0.10.0
libtpu: 0.0.40
codegen_flags: <defaults>
</compile_context>

<pallas_src>
import math

import jax
import jax.numpy as jnp
from jax.experimental import pallas as pl
from jax.experimental.pallas import tpu as pltpu


# --------------------------------------------------------------------------
# Kernels
# --------------------------------------------------------------------------
def _lora_qkv_kernel(x_ref, w_ref, b_ref, xa_ref, bB_ref, o_ref):
    # x_ref : (TN, D)        token tile
    # w_ref : (D, TOUT)      frozen qkv weight, pre-transposed OUT-tile
    # b_ref : (1, TOUT)      frozen qkv bias tile
    # xa_ref: (TN, r)        precomputed x @ A^T (hoisted out of the kernel)
    # bB_ref: (r, TOUT)      alpha * LoRA B, pre-transposed OUT-tile
    # o_ref : (TN, TOUT)
    acc = jnp.dot(x_ref[...], w_ref[...], preferred_element_type=jnp.float32)
    acc = acc + b_ref[...].astype(jnp.float32)
    acc = acc + jnp.dot(xa_ref[...], bB_ref[...],
                        preferred_element_type=jnp.float32)
    o_ref[...] = acc.astype(o_ref.dtype)


def _base_linear_kernel(x_ref, w_ref, b_ref, o_ref):
    # Used for the fold_adapter path (adapter folded into W once in wrapper).
    acc = jnp.dot(x_ref[...], w_ref[...], preferred_element_type=jnp.float32)
    acc = acc + b_ref[...].astype(jnp.float32)
    o_ref[...] = acc.astype(o_ref.dtype)


# --------------------------------------------------------------------------
# Wrapper
# --------------------------------------------------------------------------
def _round_up(n, m):
    return ((n + m - 1) // m) * m


def _pick_out_tile(out_features):
    # Lane-dense tile; OUT is padded up to a multiple of the chosen tile, so a
    # non-128-multiple OUT never produces a full-OUT block / masked stores.
    out_128 = _round_up(out_features, 128)
    for t in (512, 256, 128):
        if out_128 % t == 0:
            return t
    return 128


def lora_qkv_forward(x, w, bias, lora_A, lora_B, *, alpha=1.0,
                     token_tile=128, out_tile=None, param_dtype=None,
                     fold_adapter=False):
    """x: (B, S, D) -> (B, S, OUT); OUT = 3*D for a ViT qkv projection.

    w:      (OUT, D)  frozen Linear weight (PyTorch out x in layout)
    bias:   (OUT,)
    lora_A: (r, D)
    lora_B: (OUT, r)
    param_dtype: optional dtype (e.g. jnp.bfloat16) for the frozen operands;
                 accumulation stays f32 in-kernel.
    fold_adapter: if True (static adapters at inference) fold LoRA into W once
                  and run a plain GEMM + bias kernel.
    """
    Bsz, S, D = x.shape
    OUT, D_w = w.shape
    assert D_w == D, (D_w, D)
    r = lora_A.shape[0]
    N = Bsz * S

    w_dtype = jnp.dtype(param_dtype) if param_dtype is not None else w.dtype

    # ---- one-time host-side layout prep (outside the hot loop) ----------
    w_t = jnp.transpose(w).astype(w_dtype)                               # (D, OUT)
    a_t = jnp.transpose(lora_A).astype(w_dtype)                          # (D, r)
    bB_t = (jnp.transpose(lora_B)
            * jnp.asarray(alpha, lora_B.dtype)).astype(w_dtype)          # (r, OUT)
    bias2d = bias.reshape(1, OUT).astype(w_dtype)

    if fold_adapter:
        # Static adapter: W_eff^T = W^T + A^T @ (alpha*B)^T, computed once.
        w_t = (w_t.astype(jnp.float32)
               + jnp.dot(a_t.astype(jnp.float32), bB_t.astype(jnp.float32))
               ).astype(w_dtype)

    if out_tile is None:
        out_tile = _pick_out_tile(OUT)
    OUT_pad = _round_up(OUT, out_tile)
    if OUT_pad != OUT:
        w_t = jnp.pad(w_t, ((0, 0), (0, OUT_pad - OUT)))
        bB_t = jnp.pad(bB_t, ((0, 0), (0, OUT_pad - OUT)))
        bias2d = jnp.pad(bias2d, ((0, 0), (0, OUT_pad - OUT)))

    # Pad the token dimension to the tile.
    # TODO(synk): for hot decode paths with ragged N, handle the tail tile with
    # a masked store instead of a wrapper-side pad/slice.
    n_tok = pl.cdiv(N, token_tile)
    N_pad = n_tok * token_tile
    x2d = x.reshape(N, D)
    if N_pad != N:
        x2d = jnp.pad(x2d, ((0, N_pad - N), (0, 0)))

    n_out = OUT_pad // out_tile
    grid = (n_out, n_tok)   # token axis innermost => W^T stays resident

    # Hoisted LoRA down-projection (tiny (N, r) GEMM), kept in f32.
    if not fold_adapter:
        xa = jnp.dot(x2d, a_t, preferred_element_type=jnp.float32)       # (N_pad, r)

    # ---- cost estimate (weight-stationary traffic) ------------------------
    x_bytes = jnp.dtype(x.dtype).itemsize
    w_bytes = jnp.dtype(w_dtype).itemsize
    o_bytes = jnp.dtype(x.dtype).itemsize
    if fold_adapter:
        flops = 2 * N_pad * D * OUT_pad
        bytes_accessed = (n_out * N_pad * D * x_bytes
                          + (D * OUT_pad + OUT_pad) * w_bytes
                          + N_pad * OUT_pad * o_bytes)
    else:
        flops = 2 * N_pad * D * OUT_pad + 2 * N_pad * r * OUT_pad
        bytes_accessed = (n_out * N_pad * (D * x_bytes + r * 4)
                          + (D * OUT_pad + OUT_pad + r * OUT_pad) * w_bytes
                          + N_pad * OUT_pad * o_bytes)
    cost = pl.CostEstimate(flops=flops, transcendentals=0,
                           bytes_accessed=int(bytes_accessed))

    # ---- explicit VMEM budget (double-buffered tiles + slack) -------------
    tile_bytes = (token_tile * D * x_bytes          # x tile
                  + D * out_tile * w_bytes          # W^T tile
                  + out_tile * w_bytes              # bias tile
                  + token_tile * out_tile * o_bytes)  # out tile
    if not fold_adapter:
        tile_bytes += token_tile * r * 4 + r * out_tile * w_bytes
    vmem_limit = int(min(max(2 * tile_bytes + (2 << 20), 32 << 20), 64 << 20))

    # ---- specs -------------------------------------------------------------
    if fold_adapter:
        kernel = _base_linear_kernel
        in_specs = [
            pl.BlockSpec((token_tile, D), lambda j, i: (i, 0)),   # x tile
            pl.BlockSpec((D, out_tile), lambda j, i: (0, j)),     # W_eff^T tile
            pl.BlockSpec((1, out_tile), lambda j, i: (0, j)),     # bias tile
        ]
        args = (x2d, w_t, bias2d)
    else:
        kernel = _lora_qkv_kernel
        in_specs = [
            pl.BlockSpec((token_tile, D), lambda j, i: (i, 0)),   # x tile
            pl.BlockSpec((D, out_tile), lambda j, i: (0, j)),     # W^T tile (stationary)
            pl.BlockSpec((1, out_tile), lambda j, i: (0, j)),     # bias tile
            pl.BlockSpec((token_tile, r), lambda j, i: (i, 0)),   # xa tile
            pl.BlockSpec((r, out_tile), lambda j, i: (0, j)),     # (alpha*B)^T tile
        ]
        args = (x2d, w_t, bias2d, xa, bB_t)

    out2d = pl.pallas_call(
        kernel,
        out_shape=jax.ShapeDtypeStruct((N_pad, OUT_pad), x.dtype),
        grid_spec=pltpu.PrefetchScalarGridSpec(
            num_scalar_prefetch=0,
            grid=grid,
            in_specs=in_specs,
            out_specs=pl.BlockSpec((token_tile, out_tile), lambda j, i: (i, j)),
        ),
        compiler_params=pltpu.CompilerParams(
            dimension_semantics=("parallel", "parallel"),
            vmem_limit_bytes=vmem_limit),
        cost_estimate=cost,
    )(*args)

    if N_pad != N or OUT_pad != OUT:
        out2d = out2d[:N, :OUT]
    return out2d.reshape(Bsz, S, OUT)


# --------------------------------------------------------------------------
# Pure-JAX reference (matches the PyTorch hook semantics)
# --------------------------------------------------------------------------
def reference_forward(x, w, bias, lora_A, lora_B, alpha=1.0):
    base = jnp.einsum("bsd,od->bso", x, w) + bias
    lora = jnp.einsum("bsd,rd->bsr", x, lora_A)
    lora = jnp.einsum("bsr,or->bso", lora, lora_B)
    return base + alpha * lora


if __name__ == "__main__":
    # ViT-like qkv shapes (128-aligned so the kernel exercises the real
    # (8,128) lane layout): batch=2, seq=64, hidden=128 -> OUT = 3*128, r = 8.
    key = jax.random.PRNGKey(0)
    B, S, D, r = 2, 64, 128, 8
    OUT = 3 * D
    alpha = 1.0

    k_x, k_w, k_b, k_a, k_bb, k_w2, k_b2, k_bb2 = jax.random.split(key, 8)

    x = jax.random.normal(k_x, (B, S, D), dtype=jnp.float32)

    # Frozen qkv Linear parameters (deterministic synthetic init).
    w = jax.random.normal(k_w, (OUT, D), dtype=jnp.float32) * 0.02
    bias = jax.random.normal(k_b, (OUT,), dtype=jnp.float32) * 0.02

    # LoRA params. The module initializes B to zeros (identity adapter); we
    # also use nonzero B so the low-rank path is exercised numerically.
    bound = 1.0 / math.sqrt(D)
    lora_A = jax.random.uniform(k_a, (r, D), dtype=jnp.float32,
                                minval=-bound, maxval=bound)
    lora_B = jax.random.normal(k_bb, (OUT, r), dtype=jnp.float32) * 0.05

    # TODO(synk): the surrounding ViT backbone (self.model) is an arbitrary
    # frozen module; only the LoRA-hooked qkv Linear hot path is kernelized.

    ref = reference_forward(x, w, bias, lora_A, lora_B, alpha=alpha)

    # 1) f32 exact path.
    out = jax.block_until_ready(
        lora_qkv_forward(x, w, bias, lora_A, lora_B, alpha=alpha))
    assert out.shape == (B, S, OUT), out.shape
    assert jnp.allclose(out, ref, atol=1e-4, rtol=1e-4), "mismatch (f32)"

    # 2) Spec's actual init (B = 0 -> adapter is identity).
    out0 = jax.block_until_ready(
        lora_qkv_forward(x, w, bias, lora_A, jnp.zeros_like(lora_B),
                         alpha=alpha))
    ref0 = reference_forward(x, w, bias, lora_A, jnp.zeros_like(lora_B),
                             alpha=alpha)
    assert jnp.allclose(out0, ref0, atol=1e-4, rtol=1e-4), "mismatch (B=0)"

    # 3) bf16 frozen operands, f32 accumulation (looser tolerance).
    out_bf16 = jax.block_until_ready(
        lora_qkv_forward(x, w, bias, lora_A, lora_B, alpha=alpha,
                         param_dtype=jnp.bfloat16))
    assert jnp.allclose(out_bf16, ref, atol=2e-2, rtol=2e-2), "mismatch (bf16)"

    # 4) fold_adapter inference path (adapter folded into W once).
    out_fold = jax.block_until_ready(
        lora_qkv_forward(x, w, bias, lora_A, lora_B, alpha=alpha,
                         fold_adapter=True))
    assert jnp.allclose(out_fold, ref, atol=1e-4, rtol=1e-4), "mismatch (fold)"

    # 5) Non-128-multiple OUT exercises the OUT-padding path.
    OUT2 = 200
    w2 = jax.random.normal(k_w2, (OUT2, D), dtype=jnp.float32) * 0.02
    bias2 = jax.random.normal(k_b2, (OUT2,), dtype=jnp.float32) * 0.02
    lora_B2 = jax.random.normal(k_bb2, (OUT2, r), dtype=jnp.float32) * 0.05
    out2 = jax.block_until_ready(
        lora_qkv_forward(x, w2, bias2, lora_A, lora_B2, alpha=alpha))
    ref2 = reference_forward(x, w2, bias2, lora_A, lora_B2, alpha=alpha)
    assert out2.shape == (B, S, OUT2), out2.shape
    assert jnp.allclose(out2, ref2, atol=1e-4, rtol=1e-4), "mismatch (OUT pad)"

    print("KERNEL_OK")
</pallas_src>

<mosaic_0001>
module attributes {stable_mosaic.version = 11 : i64} {
  func.func @_lora_qkv_kernel(%arg0: i32, %arg1: i32, %arg2: memref<128x128xf32, #tpu.memory_space<vmem>>, %arg3: memref<128x128xf32, #tpu.memory_space<vmem>>, %arg4: memref<1x128xf32, #tpu.memory_space<vmem>>, %arg5: memref<128x8xf32, #tpu.memory_space<vmem>>, %arg6: memref<8x128xf32, #tpu.memory_space<vmem>>, %arg7: memref<128x128xf32, #tpu.memory_space<vmem>>) attributes {dimension_semantics = [#tpu.dimension_semantics<parallel>, #tpu.dimension_semantics<parallel>], iteration_bounds = array<i64: 3, 1>, scalar_prefetch = 0 : i64, scratch_operands = 0 : i64, tpu.core_type = #tpu.core_type<tc>, window_params = [{transform_indices = @transform_0, window_bounds = array<i64: 128, 128>}, {transform_indices = @transform_1, window_bounds = array<i64: 128, 128>}, {transform_indices = @transform_2, window_bounds = array<i64: 1, 128>}, {transform_indices = @transform_3, window_bounds = array<i64: 128, 8>}, {transform_indices = @transform_4, window_bounds = array<i64: 8, 128>}, {transform_indices = @transform_5, window_bounds = array<i64: 128, 128>}]} {
    %c0 = arith.constant 0 : index
    %c0_0 = arith.constant 0 : index
    %0 = vector.load %arg2[%c0, %c0_0] : memref<128x128xf32, #tpu.memory_space<vmem>>, vector<128x128xf32>
    %c0_1 = arith.constant 0 : index
    %c0_2 = arith.constant 0 : index
    %1 = vector.load %arg3[%c0_1, %c0_2] : memref<128x128xf32, #tpu.memory_space<vmem>>, vector<128x128xf32>
    %cst = arith.constant dense<0.000000e+00> : vector<128x128xf32>
    %2 = tpu.matmul %0, %1, %cst {dimension_numbers = #tpu.dot_dimension_numbers<[1], [0], [0], [1], [0, 0, 1, 1], [], []>} : vector<128x128xf32>, vector<128x128xf32>, vector<128x128xf32> -> vector<128x128xf32>
    %c0_3 = arith.constant 0 : index
    %c0_4 = arith.constant 0 : index
    %3 = vector.load %arg4[%c0_3, %c0_4] : memref<1x128xf32, #tpu.memory_space<vmem>>, vector<1x128xf32>
    %4 = vector.broadcast %3 : vector<1x128xf32> to vector<128x128xf32>
    %5 = arith.addf %2, %4 : vector<128x128xf32>
    %c0_5 = arith.constant 0 : index
    %c0_6 = arith.constant 0 : index
    %6 = vector.load %arg5[%c0_5, %c0_6] : memref<128x8xf32, #tpu.memory_space<vmem>>, vector<128x8xf32>
    %c0_7 = arith.constant 0 : index
    %c0_8 = arith.constant 0 : index
    %7 = vector.load %arg6[%c0_7, %c0_8] : memref<8x128xf32, #tpu.memory_space<vmem>>, vector<8x128xf32>
    %cst_9 = arith.constant dense<0.000000e+00> : vector<128x128xf32>
    %8 = tpu.matmul %6, %7, %cst_9 {dimension_numbers = #tpu.dot_dimension_numbers<[1], [0], [0], [1], [0, 0, 1, 1], [], []>} : vector<128x8xf32>, vector<8x128xf32>, vector<128x128xf32> -> vector<128x128xf32>
    %9 = arith.addf %5, %8 : vector<128x128xf32>
    %c0_10 = arith.constant 0 : index
    %c0_11 = arith.constant 0 : index
    %10 = vector.load %arg7[%c0_10, %c0_11] : memref<128x128xf32, #tpu.memory_space<vmem>>, vector<128x128xf32>
    tpu.vector_store %arg7[%c0_10, %c0_11], %9 {strides = array<i32>} : memref<128x128xf32, #tpu.memory_space<vmem>>, vector<128x128xf32>,
    return
  }
  func.func @transform_0(%arg0: i32, %arg1: i32) -> (i32, i32) {
    %c0_i32 = arith.constant 0 : i32
    %c0_i32_0 = arith.constant 0 : i32
    return %arg1, %c0_i32 : i32, i32
  }
  func.func @transform_1(%arg0: i32, %arg1: i32) -> (i32, i32) {
    %c0_i32 = arith.constant 0 : i32
    %c0_i32_0 = arith.constant 0 : i32
    return %c0_i32, %arg0 : i32, i32
  }
  func.func @transform_2(%arg0: i32, %arg1: i32) -> (i32, i32) {
    %c0_i32 = arith.constant 0 : i32
    %c0_i32_0 = arith.constant 0 : i32
    return %c0_i32, %arg0 : i32, i32
  }
  func.func @transform_3(%arg0: i32, %arg1: i32) -> (i32, i32) {
    %c0_i32 = arith.constant 0 : i32
    %c0_i32_0 = arith.constant 0 : i32
    return %arg1, %c0_i32 : i32, i32
  }
  func.func @transform_4(%arg0: i32, %arg1: i32) -> (i32, i32) {
    %c0_i32 = arith.constant 0 : i32
    %c0_i32_0 = arith.constant 0 : i32
    return %c0_i32, %arg0 : i32, i32
  }
  func.func @transform_5(%arg0: i32, %arg1: i32) -> (i32, i32) {
    %c0_i32 = arith.constant 0 : i32
    return %arg1, %arg0 : i32, i32
  }
}

</mosaic_0001>

<llo_original>
// kernel: tpu_custom_call.1
$region0: #{tpu_custom_call.1}
  #allocation0 [shape = 'u32[]', space=smem, size = 0x4, offset = 0x4, fixed_abs, tag = 'smem constant byte address 0x4 - core index']
  #allocation1 [shape = 'u32[144,128]{1,0:T(1,128)}', space=vmem, size = 0x12000, scoped, tag = 'internal scratch']
  %s0 = inlined_call_operand.vmem [shape: f32[128,128], index: 0, kind: input, shape index: {}]
  %s1 = inlined_call_operand.hbm [shape: f32[128,384], index: 1, kind: input, shape index: {}]
  %s2 = inlined_call_operand.vmem [shape: f32[1,384], index: 2, kind: input, shape index: {}]
  %s3 = inlined_call_operand.vmem [shape: f32[128,8], index: 3, kind: input, shape index: {}]
  %s4 = inlined_call_operand.hbm [shape: f32[8,384], index: 4, kind: input, shape index: {}]
  %s5 = inlined_call_operand.hbm [shape: f32[128,384], index: 5, kind: output, shape index: {}]
  %s6 = sld [smem:[#allocation0]]
  $region61: #{tpu_custom_call.1} parent=0
    _
  %s8 = ssub.s32 1, %s6
  %s9 = scalar_select 0, %s8, %s6
  $region1: #{tpu_custom_call.1} parent=0
    #allocation2 [shape = 'u8[131072]{0}', space=vmem, size = 0x20000, scoped, tag = 'input window, operand 1']
    #allocation3 [shape = 's32[2]{0}', space=sflag, size = 0x8, scoped, tag = 'scoped memory for tpu_custom_call.1']
    #allocation4 [shape = 's32[2]{0}', space=sflag, size = 0x8, scoped, tag = 'scoped memory for tpu_custom_call.1']
    #allocation5 [shape = 'u8[8192]{0}', space=vmem, size = 0x2000, scoped, tag = 'input window, operand 4']
    #allocation6 [shape = 's32[2]{0}', space=sflag, size = 0x8, scoped, tag = 'scoped memory for tpu_custom_call.1']
    #allocation7 [shape = 'u8[131072]{0}', space=vmem, size = 0x20000, scoped, tag = 'output window, operand 0']
    %10 = vsyncpa [#allocation3], 0
    %s11 = scalar_lea.sflag [#allocation3], 1
    %12 = vsyncpa %s11, 0
    %13 = vsyncpa [#allocation6], 0
    %s14 = scalar_lea.sflag [#allocation6], 1
    %15 = vsyncpa %s14, 0
    %16 = vsyncpa [#allocation4], 0
    %s17 = scalar_lea.sflag [#allocation4], 1
    %18 = vsyncpa %s17, 0
    loop: start=0, step=1, limit=5
    $region2: #{tpu_custom_call.1} parent=1 // loop_pre_header
      _
    $region3: #{tpu_custom_call.1} parent=1 // loop_header
      %s20 = sphi 0, %s24
      %p21 = scmp.ge.s32.totalorder %s20, 5
      %s27 = sphi 0, %s39
      %s28 = sphi 0, %s35
      %s29 = sphi 0, %s27
      %s30 = sphi 0, %s28
      %s31 = sphi 0, %s29
      %s32 = sphi 0, %s30
      %s42 = sphi 0, %s44
      %s45 = sphi 0, %s42
      %s46 = sphi 0, %s45
      %s62 = sphi 0, %s46
      %s68 = sphi 0, %s70
      %s71 = sphi 0, %s68
      %s72 = sphi 0, %s71
      %s88 = sphi 0, %s72
      %s94 = sphi 0, %s96
      %s97 = sphi 0, %s94
      %s98 = sphi 0, %s97
      %s114 = sphi 0, %s98
      %s120 = sphi 0, %s122
      %s123 = sphi 0, %s120
      %s124 = sphi 0, %s123
      %s140 = sphi 0, %s124
      %s146 = sphi 0, %s148
      %s149 = sphi 0, %s146
      %s150 = sphi 0, %s149
      %s166 = sphi 0, %s150
      %s174 = sphi 0, %s176
      %s177 = sphi 0, %s174
      %s178 = sphi 0, %s177
      %s194 = sphi 0, %s178
    $region4: #{tpu_custom_call.1} parent=1 // loop_header_branch
      %23 = sbr.rel (%p21) target = $region8
    $region5: #{tpu_custom_call.1} parent=1 // loop_body
      %s25 = ssub.s32 %s20, 1
      %s26 = ssub.s32 %s20, 2
      %s33 = sadd.s32 1, %s28
      %p34 = scmp.ge.s32.totalorder %s33, 1
      %s35 = scalar_select %p34, 0, %s33
      %s36 = sadd.s32 1, %s27
      %s37 = scalar_select %p34, %s36, %s27
      %p38 = scmp.ge.s32.totalorder %s37, 3
      %s39 = scalar_select %p38, 0, %s37
      %s40 = ssub.s32 %s28, %s35
      %p41 = scmp.eq.s32.totalorder %s40, 0
      %s43 = sadd.s32 %s42, 1
      %s44 = scalar_select %p41, %s42, %s43
      %p47 = pneg %p41
      %p48 = scmp.eq.s32.totalorder %s20, 2
      %p49 = por %p47, %p48
      %p50 = scmp.ne.s32.totalorder %s42, %s45
      %p51 = scmp.eq.s32.totalorder %s20, 0
      %p52 = por %p50, %p51
      %p53 = scmp.ne.s32.totalorder %s42, %s45
      %p54 = scmp.eq.s32.totalorder %s25, 2
      %p55 = por %p53, %p54
      %p56 = scmp.ne.s32.totalorder %s45, %s46
      %p57 = scmp.eq.s32.totalorder %s25, 0
      %p58 = por %p56, %p57
      %p59 = scmp.ne.s32.totalorder %s45, %s46
      %p60 = scmp.eq.s32.totalorder %s26, 2
      %p61 = por %p59, %p60
      %p63 = scmp.ne.s32.totalorder %s46, %s62
      %p64 = scmp.eq.s32.totalorder %s26, 0
      %p65 = por %p63, %p64
      %s66 = ssub.s32 %s27, %s39
      %p67 = scmp.eq.s32.totalorder %s66, 0
      %s69 = sadd.s32 %s68, 1
      %s70 = scalar_select %p67, %s68, %s69
      %p73 = pneg %p67
      %p74 = scmp.eq.s32.totalorder %s20, 2
      %p75 = por %p73, %p74
      %p76 = scmp.ne.s32.totalorder %s68, %s71
      %p77 = scmp.eq.s32.totalorder %s20, 0
      %p78 = por %p76, %p77
      %p79 = scmp.ne.s32.totalorder %s68, %s71
      %p80 = scmp.eq.s32.totalorder %s25, 2
      %p81 = por %p79, %p80
      %p82 = scmp.ne.s32.totalorder %s71, %s72
      %p83 = scmp.eq.s32.totalorder %s25, 0
      %p84 = por %p82, %p83
      %p85 = scmp.ne.s32.totalorder %s71, %s72
      %p86 = scmp.eq.s32.totalorder %s26, 2
      %p87 = por %p85, %p86
      %p89 = scmp.ne.s32.totalorder %s72, %s88
      %p90 = scmp.eq.s32.totalorder %s26, 0
      %p91 = por %p89, %p90
      %s92 = ssub.s32 %s27, %s39
      %p93 = scmp.eq.s32.totalorder %s92, 0
      %s95 = sadd.s32 %s94, 1
      %s96 = scalar_select %p93, %s94, %s95
      %p99 = pneg %p93
      %p100 = scmp.eq.s32.totalorder %s20, 2
      %p101 = por %p99, %p100
      %p102 = scmp.ne.s32.totalorder %s94, %s97
      %p103 = scmp.eq.s32.totalorder %s20, 0
      %p104 = por %p102, %p103
      %p105 = scmp.ne.s32.totalorder %s94, %s97
      %p106 = scmp.eq.s32.totalorder %s25, 2
      %p107 = por %p105, %p106
      %p108 = scmp.ne.s32.totalorder %s97, %s98
      %p109 = scmp.eq.s32.totalorder %s25, 0
      %p110 = por %p108, %p109
      %p111 = scmp.ne.s32.totalorder %s97, %s98
      %p112 = scmp.eq.s32.totalorder %s26, 2
      %p113 = por %p111, %p112
      %p115 = scmp.ne.s32.totalorder %s98, %s114
      %p116 = scmp.eq.s32.totalorder %s26, 0
      %p117 = por %p115, %p116
      %s118 = ssub.s32 %s28, %s35
      %p119 = scmp.eq.s32.totalorder %s118, 0
      %s121 = sadd.s32 %s120, 1
      %s122 = scalar_select %p119, %s120, %s121
      %p125 = pneg %p119
      %p126 = scmp.eq.s32.totalorder %s20, 2
      %p127 = por %p125, %p126
      %p128 = scmp.ne.s32.totalorder %s120, %s123
      %p129 = scmp.eq.s32.totalorder %s20, 0
      %p130 = por %p128, %p129
      %p131 = scmp.ne.s32.totalorder %s120, %s123
      %p132 = scmp.eq.s32.totalorder %s25, 2
      %p133 = por %p131, %p132
      %p134 = scmp.ne.s32.totalorder %s123, %s124
      %p135 = scmp.eq.s32.totalorder %s25, 0
      %p136 = por %p134, %p135
      %p137 = scmp.ne.s32.totalorder %s123, %s124
      %p138 = scmp.eq.s32.totalorder %s26, 2
      %p139 = por %p137, %p138
      %p141 = scmp.ne.s32.totalorder %s124, %s140
      %p142 = scmp.eq.s32.totalorder %s26, 0
      %p143 = por %p141, %p142
      %s144 = ssub.s32 %s27, %s39
      %p145 = scmp.eq.s32.totalorder %s144, 0
      %s147 = sadd.s32 %s146, 1
      %s148 = scalar_select %p145, %s146, %s147
      %p151 = pneg %p145
      %p152 = scmp.eq.s32.totalorder %s20, 2
      %p153 = por %p151, %p152
      %p154 = scmp.ne.s32.totalorder %s146, %s149
      %p155 = scmp.eq.s32.totalorder %s20, 0
      %p156 = por %p154, %p155
      %p157 = scmp.ne.s32.totalorder %s146, %s149
      %p158 = scmp.eq.s32.totalorder %s25, 2
      %p159 = por %p157, %p158
      %p160 = scmp.ne.s32.totalorder %s149, %s150
      %p161 = scmp.eq.s32.totalorder %s25, 0
      %p162 = por %p160, %p161
      %p163 = scmp.ne.s32.totalorder %s149, %s150
      %p164 = scmp.eq.s32.totalorder %s26, 2
      %p165 = por %p163, %p164
      %p167 = scmp.ne.s32.totalorder %s150, %s166
      %p168 = scmp.eq.s32.totalorder %s26, 0
      %p169 = por %p167, %p168
      %s170 = ssub.s32 %s28, %s35
      %s171 = ssub.s32 %s27, %s39
      %s172 = sor.u32 %s170, %s171
      %p173 = scmp.eq.s32.totalorder %s172, 0
      %s175 = sadd.s32 %s174, 1
      %s176 = scalar_select %p173, %s174, %s175
      %p179 = pneg %p173
      %p180 = scmp.eq.s32.totalorder %s20, 2
      %p181 = por %p179, %p180
      %p182 = scmp.ne.s32.totalorder %s174, %s177
      %p183 = scmp.eq.s32.totalorder %s20, 0
      %p184 = por %p182, %p183
      %p185 = scmp.ne.s32.totalorder %s174, %s177
      %p186 = scmp.eq.s32.totalorder %s25, 2
      %p187 = por %p185, %p186
      %p188 = scmp.ne.s32.totalorder %s177, %s178
      %p189 = scmp.eq.s32.totalorder %s25, 0
      %p190 = por %p188, %p189
      %p191 = scmp.ne.s32.totalorder %s177, %s178
      %p192 = scmp.eq.s32.totalorder %s26, 2
      %p193 = por %p191, %p192
      %p195 = scmp.ne.s32.totalorder %s178, %s194
      %p196 = scmp.eq.s32.totalorder %s26, 0
      %p197 = por %p195, %p196
      %p198 = scmp.le.s32.totalorder 1, %s20
      %p199 = scmp.lt.s32.totalorder %s20, 4
      %p200 = pnand %p198, %p199
      %p201 = pneg %p200
      // Predicated region
      $region9: #{tpu_custom_call.1} parent=5 // pred_check
        _
      $region10: #{tpu_custom_call.1} parent=5 // pred_check_branch
        %203 = sbr.rel (%p200) target = $region12
      $region11: #{tpu_custom_call.1} parent=5 // pred_region
        %s204 = ssub.s32 %s20, 1
        // Predicated region
        $region13: #{tpu_custom_call.1} parent=11 // pred_check
          %p205 = pneg %p58
        $region14: #{tpu_custom_call.1} parent=11 // pred_check_branch
          %207 = sbr.rel (%p205) target = $region16
        $region15: #{tpu_custom_call.1} parent=11 // pred_region
          %s208 = smul.u32 16, %s30
          %p209 = scmp.lt.s32.totalorder %s208, 15
          %s210 = scalar_select %p209, %s208, 15
          %s211 = smul.addr %s210, 8
          %s212 = scalar_lea.vmem %s0, %s211
          %s213 = smul.u32 16, %s30
        $region16: #{tpu_custom_call.1} parent=11 // pred_fallthru
          _
        // Predicated region
        $region17: #{tpu_custom_call.1} parent=11 // pred_check
          %p214 = pneg %p136
        $region18: #{tpu_custom_call.1} parent=11 // pred_check_branch
          %216 = sbr.rel (%p214) target = $region20
        $region19: #{tpu_custom_call.1} parent=11 // pred_region
          %s217 = smul.u32 16, %s30
          %p218 = scmp.lt.s32.totalorder %s217, 15
          %s219 = scalar_select %p218, %s217, 15
          %s220 = smul.addr %s219, 8
          %s221 = scalar_lea.vmem %s3, %s220
          %s222 = smul.u32 16, %s30
        $region20: #{tpu_custom_call.1} parent=11 // pred_fallthru
          _
      $region12: #{tpu_custom_call.1} parent=5 // pred_fallthru
        _
      %p223 = scmp.lt.s32.totalorder %s20, 3
      // Predicated region
      $region21: #{tpu_custom_call.1} parent=5 // pred_check
        %p224 = pneg %p223
      $region22: #{tpu_custom_call.1} parent=5 // pred_check_branch
        %226 = sbr.rel (%p224) target = $region24
      $region23: #{tpu_custom_call.1} parent=5 // pred_region
        // Predicated region
        $region25: #{tpu_custom_call.1} parent=23 // pred_check
          %p227 = pneg %p78
        $region26: #{tpu_custom_call.1} parent=23 // pred_check_branch
          %229 = sbr.rel (%p227) target = $region28
        $region27: #{tpu_custom_call.1} parent=23 // pred_region
          %s230 = sand.u32 %s68, 1
          %s231 = scalar_lea.sflag [#allocation3], %s230
          %s232 = sand.u32 %s68, 1
          %s233 = smul.addr %s232, 128
          %s234 = scalar_lea.vmem [#allocation2], %s233
          %s236 = ssub.s32 2048, 2048
          %237 = vsyncadd %s231, %s236
          %s238 = smul.addr %s27, 128
          %s239 = scalar_lea.hbm %s1, %s238
          %s240 = sshll.u32 %s234, 4
          %s241 = int_to_ptr.vmem [resolvable:$true] %s240
          %246 = dma.hbm_to_vmem [thread:$0]  %s239, 2048, %s241, %s231, 384, 128, 8
        $region28: #{tpu_custom_call.1} parent=23 // pred_fallthru
          _
        // Predicated region
        $region29: #{tpu_custom_call.1} parent=23 // pred_check
          %p247 = pneg %p104
        $region30: #{tpu_custom_call.1} parent=23 // pred_check_branch
          %249 = sbr.rel (%p247) target = $region32
        $region31: #{tpu_custom_call.1} parent=23 // pred_region
          %p250 = scmp.lt.s32.totalorder %s27, 2
          %s251 = scalar_select %p250, %s27, 2
          %s252 = scalar_lea.vmem %s2, %s251
        $region32: #{tpu_custom_call.1} parent=23 // pred_fallthru
          _
        // Predicated region
        $region33: #{tpu_custom_call.1} parent=23 // pred_check
          %p253 = pneg %p156
        $region34: #{tpu_custom_call.1} parent=23 // pred_check_branch
          %255 = sbr.rel (%p253) target = $region36
        $region35: #{tpu_custom_call.1} parent=23 // pred_region
          %s256 = sand.u32 %s146, 1
          %s257 = scalar_lea.sflag [#allocation6], %s256
          %s258 = sand.u32 %s146, 1
          %s259 = smul.addr %s258, 8
          %s260 = scalar_lea.vmem [#allocation5], %s259
          %s262 = ssub.s32 128, 128
          %263 = vsyncadd %s257, %s262
          %s264 = smul.addr %s27, 128
          %s265 = scalar_lea.hbm %s4, %s264
          %s267 = sshll.u32 %s260, 4
          %s268 = int_to_ptr.vmem [resolvable:$true] %s267
          %270 = dma.hbm_to_vmem [thread:$0]  %s265, 128, %s268, %s257
        $region36: #{tpu_custom_call.1} parent=23 // pred_fallthru
          _
      $region24: #{tpu_custom_call.1} parent=5 // pred_fallthru
        _
      %p271 = scmp.le.s32.totalorder 1, %s20
      %p272 = scmp.lt.s32.totalorder %s20, 4
      %p273 = pnand %p271, %p272
      %p274 = pneg %p273
      // Predicated region
      $region37: #{tpu_custom_call.1} parent=5 // pred_check
        _
      $region38: #{tpu_custom_call.1} parent=5 // pred_check_branch
        %276 = sbr.rel (%p273) target = $region40
      $region39: #{tpu_custom_call.1} parent=5 // pred_region
        %s277 = ssub.s32 %s20, 1
        %s278 = sand.u32 %s71, 1
        %s279 = scalar_lea.sflag [#allocation3], %s278
        %s280 = sand.u32 %s71, 1
        %s281 = smul.addr %s280, 128
        %s282 = scalar_lea.vmem [#allocation2], %s281
        // Predicated region
        $region41: #{tpu_custom_call.1} parent=39 // pred_check
          %p283 = pneg %p84
        $region42: #{tpu_custom_call.1} parent=39 // pred_check_branch
          %285 = sbr.rel (%p283) target = $region44
        $region43: #{tpu_custom_call.1} parent=39 // pred_region
          %286 = dma.done %s279, 2048
        $region44: #{tpu_custom_call.1} parent=39 // pred_fallthru
          _
        %s287 = sand.u32 %s149, 1
        %s288 = scalar_lea.sflag [#allocation6], %s287
        %s289 = sand.u32 %s149, 1
        %s290 = smul.addr %s289, 8
        %s291 = scalar_lea.vmem [#allocation5], %s290
        // Predicated region
        $region45: #{tpu_custom_call.1} parent=39 // pred_check
          %p292 = pneg %p162
        $region46: #{tpu_custom_call.1} parent=39 // pred_check_branch
          %294 = sbr.rel (%p292) target = $region48
        $region47: #{tpu_custom_call.1} parent=39 // pred_region
          %295 = dma.done %s288, 128
        $region48: #{tpu_custom_call.1} parent=39 // pred_fallthru
          _
        %s296 = smul.u32 16, %s30
        %p297 = scmp.lt.s32.totalorder %s296, 15
        %s298 = scalar_select %p297, %s296, 15
        %s299 = smul.addr %s298, 8
        %s300 = scalar_lea.vmem %s0, %s299
        %p301 = pneg %p58
        %p302 = pneg %p55
        %s303 = sand.u32 %s71, 1
        %s304 = scalar_lea.sflag [#allocation3], %s303
        %s305 = sand.u32 %s71, 1
        %s306 = smul.addr %s305, 128
        %s307 = scalar_lea.vmem [#allocation2], %s306
        %p308 = pneg %p84
        %p309 = pneg %p81
        %p310 = scmp.lt.s32.totalorder %s29, 2
        %s311 = scalar_select %p310, %s29, 2
        %s312 = scalar_lea.vmem %s2, %s311
        %p313 = pneg %p110
        %p314 = pneg %p107
        %s315 = smul.u32 16, %s30
        %p316 = scmp.lt.s32.totalorder %s315, 15
        %s317 = scalar_select %p316, %s315, 15
        %s318 = smul.addr %s317, 8
        %s319 = scalar_lea.vmem %s3, %s318
        %p320 = pneg %p136
        %p321 = pneg %p133
        %s322 = sand.u32 %s149, 1
        %s323 = scalar_lea.sflag [#allocation6], %s322
        %s324 = sand.u32 %s149, 1
        %s325 = smul.addr %s324, 8
        %s326 = scalar_lea.vmem [#allocation5], %s325
        %p327 = pneg %p162
        %p328 = pneg %p159
        %p329 = pneg %p190
        %p330 = pneg %p187
        %s331 = sand.u32 %s177, 1
        %s332 = scalar_lea.sflag [#allocation4], %s331
        %s333 = sand.u32 %s177, 1
        %s334 = smul.addr %s333, 128
        %s335 = scalar_lea.vmem [#allocation7], %s334
        %s336 = smul.u32 16, %s30
        %p337 = scmp.lt.s32.totalorder %s336, 15
        %s338 = scalar_select %p337, %s336, 15
        %s339 = smul.addr %s338, 8
        %s340 = scalar_lea.vmem %s0, %s339
        %s341 = smul.u32 16, %s30
        %p342 = scmp.lt.s32.totalorder %s29, 2
        %s343 = scalar_select %p342, %s29, 2
        %s344 = scalar_lea.vmem %s2, %s343
        %s345 = smul.u32 16, %s30
        %p346 = scmp.lt.s32.totalorder %s345, 15
        %s347 = scalar_select %p346, %s345, 15
        %s348 = smul.addr %s347, 8
        %s349 = scalar_lea.vmem %s3, %s348
        %s350 = smul.u32 16, %s30
        %s351 = smul.u32 16, %s30
        %v352 = vld [vmem:[%s340] sm:$0xff]
        %v353 = vld [vmem:[%s340 + $0x8] sm:$0xff]
        %v354 = vld [vmem:[%s340 + $0x10] sm:$0xff]
        %v355 = vld [vmem:[%s340 + $0x18] sm:$0xff]
        %v356 = vld [vmem:[%s340 + $0x20] sm:$0xff]
        %v357 = vld [vmem:[%s340 + $0x28] sm:$0xff]
        %v358 = vld [vmem:[%s340 + $0x30] sm:$0xff]
        %v359 = vld [vmem:[%s340 + $0x38] sm:$0xff]
        %v360 = vld [vmem:[%s340 + $0x40] sm:$0xff]
        %v361 = vld [vmem:[%s340 + $0x48] sm:$0xff]
        %v362 = vld [vmem:[%s340 + $0x50] sm:$0xff]
        %v363 = vld [vmem:[%s340 + $0x58] sm:$0xff]
        %v364 = vld [vmem:[%s340 + $0x60] sm:$0xff]
        %v365 = vld [vmem:[%s340 + $0x68] sm:$0xff]
        %v366 = vld [vmem:[%s340 + $0x70] sm:$0xff]
        %v367 = vld [vmem:[%s340 + $0x78] sm:$0xff]
        %v368 = vld [vmem:[%s282] sm:$0xff]
        %v369 = vld [vmem:[%s282 + $0x8] sm:$0xff]
        %v370 = vld [vmem:[%s282 + $0x10] sm:$0xff]
        %v371 = vld [vmem:[%s282 + $0x18] sm:$0xff]
        %v372 = vld [vmem:[%s282 + $0x20] sm:$0xff]
        %v373 = vld [vmem:[%s282 + $0x28] sm:$0xff]
        %v374 = vld [vmem:[%s282 + $0x30] sm:$0xff]
        %v375 = vld [vmem:[%s282 + $0x38] sm:$0xff]
        %v376 = vld [vmem:[%s282 + $0x40] sm:$0xff]
        %v377 = vld [vmem:[%s282 + $0x48] sm:$0xff]
        %v378 = vld [vmem:[%s282 + $0x50] sm:$0xff]
        %v379 = vld [vmem:[%s282 + $0x58] sm:$0xff]
        %v380 = vld [vmem:[%s282 + $0x60] sm:$0xff]
        %v381 = vld [vmem:[%s282 + $0x68] sm:$0xff]
        %v382 = vld [vmem:[%s282 + $0x70] sm:$0xff]
        %v383 = vld [vmem:[%s282 + $0x78] sm:$0xff]
        %v384 = vld [vmem:[%s344] sm:$0x1]
        %v386 = vlaneseq
        %v387 = vshrl.u32 %v386, 7
        %v388 = vsub.s32 0, %v387
        %v389 = vrot.slane %v384, %v388
        %391 = vmatprep.subr.mxu0 0.0
        %392 = vmatpush1.msra.mxu0 %v383
        %393 = vmatprep.subr.mxu0 0.0
        %394 = vmatpush1.msra.mxu0 %v382
        %395 = vmatprep.subr.mxu0 0.0
        %396 = vmatpush1.msra.mxu0 %v381
        %397 = vmatprep.subr.mxu0 0.0
        %398 = vmatpush1.msra.mxu0 %v380
        %399 = vmatprep.subr.mxu0 0.0
        %400 = vmatpush1.msra.mxu0 %v379
        %401 = vmatprep.subr.mxu0 0.0
        %402 = vmatpush1.msra.mxu0 %v378
        %403 = vmatprep.subr.mxu0 0.0
        %404 = vmatpush1.msra.mxu0 %v377
        %405 = vmatprep.subr.mxu0 0.0
        %406 = vmatpush1.msra.mxu0 %v376
        %407 = vmatprep.subr.mxu0 0.0
        %408 = vmatpush1.msra.mxu0 %v375
        %409 = vmatprep.subr.mxu0 0.0
        %410 = vmatpush1.msra.mxu0 %v374
        %411 = vmatprep.subr.mxu0 0.0
        %412 = vmatpush1.msra.mxu0 %v373
        %413 = vmatprep.subr.mxu0 0.0
        %414 = vmatpush1.msra.mxu0 %v372
        %415 = vmatprep.subr.mxu0 0.0
        %416 = vmatpush1.msra.mxu0 %v371
        %417 = vmatprep.subr.mxu0 0.0
        %418 = vmatpush1.msra.mxu0 %v370
        %419 = vmatprep.subr.mxu0 0.0
        %420 = vmatpush1.msra.mxu0 %v369
        %421 = vmatprep.subr.mxu0 0.0
        %422 = vmatpush1.msra.mxu0 %v368
        %423 = vmatprep.subr.mxu0 0.0
        %424 = vmatpush2.msra.mxu0 0.0
        %425 = vmatprep.subr.mxu0 0.0
        %426 = vmatpush2.msra.mxu0 0.0
        %427 = vmatprep.subr.mxu0 0.0
        %428 = vmatpush2.msra.mxu0 0.0
        %429 = vmatprep.subr.mxu0 0.0
        %430 = vmatpush2.msra.mxu0 0.0
        %431 = vmatprep.subr.mxu0 0.0
        %432 = vmatpush2.msra.mxu0 0.0
        %433 = vmatprep.subr.mxu0 0.0
        %434 = vmatpush2.msra.mxu0 0.0
        %435 = vmatprep.subr.mxu0 0.0
        %436 = vmatpush2.msra.mxu0 0.0
        %437 = vmatprep.subr.mxu0 0.0
        %438 = vmatpush2.msra.mxu0 0.0
        %439 = vmatprep.subr.mxu0 0.0
        %440 = vmatpush2.msra.mxu0 0.0
        %441 = vmatprep.subr.mxu0 0.0
        %442 = vmatpush2.msra.mxu0 0.0
        %443 = vmatprep.subr.mxu0 0.0
        %444 = vmatpush2.msra.mxu0 0.0
        %445 = vmatprep.subr.mxu0 0.0
        %446 = vmatpush2.msra.mxu0 0.0
        %447 = vmatprep.subr.mxu0 0.0
        %448 = vmatpush2.msra.mxu0 0.0
        %449 = vmatprep.subr.mxu0 0.0
        %450 = vmatpush2.msra.mxu0 0.0
        %451 = vmatprep.subr.mxu0 0.0
        %452 = vmatpush2.msra.mxu0 0.0
        %453 = vmatprep.subr.mxu0 0.0
        %454 = vmatpush2.msra.mxu0 0.0
        %455 = vmatprep.mubr.f32.mxu0 0.0
        %456 = vmatmul.mubr.f32.gmra.mxu0 %v352
        %v457 = vpop.f32.mrf.mxu0
        %v458 = vadd.f32 %v389, %v457
        %v459 = vpop.f32.mrf.mxu0
        %460 = vmatprep.mubr.f32.mxu0 0.0
        %461 = vmatmul.mubr.f32.gmra.mxu0 %v353
        %v462 = vpop.f32.mrf.mxu0
        %v463 = vadd.f32 %v389, %v462
        %v464 = vpop.f32.mrf.mxu0
        %465 = vmatprep.mubr.f32.mxu0 0.0
        %466 = vmatmul.mubr.f32.gmra.mxu0 %v354
        %v467 = vpop.f32.mrf.mxu0
        %v468 = vadd.f32 %v389, %v467
        %v469 = vpop.f32.mrf.mxu0
        %470 = vmatprep.mubr.f32.mxu0 0.0
        %471 = vmatmul.mubr.f32.gmra.mxu0 %v355
        %v472 = vpop.f32.mrf.mxu0
        %v473 = vadd.f32 %v389, %v472
        %v474 = vpop.f32.mrf.mxu0
        %475 = vmatprep.mubr.f32.mxu0 0.0
        %476 = vmatmul.mubr.f32.gmra.mxu0 %v356
        %v477 = vpop.f32.mrf.mxu0
        %v478 = vadd.f32 %v389, %v477
        %v479 = vpop.f32.mrf.mxu0
        %480 = vmatprep.mubr.f32.mxu0 0.0
        %481 = vmatmul.mubr.f32.gmra.mxu0 %v357
        %v482 = vpop.f32.mrf.mxu0
        %v483 = vadd.f32 %v389, %v482
        %v484 = vpop.f32.mrf.mxu0
        %485 = vmatprep.mubr.f32.mxu0 0.0
        %486 = vmatmul.mubr.f32.gmra.mxu0 %v358
        %v487 = vpop.f32.mrf.mxu0
        %v488 = vadd.f32 %v389, %v487
        %v489 = vpop.f32.mrf.mxu0
        %490 = vmatprep.mubr.f32.mxu0 0.0
        %491 = vmatmul.mubr.f32.gmra.mxu0 %v359
        %v492 = vpop.f32.mrf.mxu0
        %v493 = vadd.f32 %v389, %v492
        %v494 = vpop.f32.mrf.mxu0
        %495 = vmatprep.mubr.f32.mxu0 0.0
        %496 = vmatmul.mubr.f32.gmra.mxu0 %v360
        %v497 = vpop.f32.mrf.mxu0
        %v498 = vadd.f32 %v389, %v497
        %v499 = vpop.f32.mrf.mxu0
        %500 = vmatprep.mubr.f32.mxu0 0.0
        %501 = vmatmul.mubr.f32.gmra.mxu0 %v361
        %v502 = vpop.f32.mrf.mxu0
        %v503 = vadd.f32 %v389, %v502
        %v504 = vpop.f32.mrf.mxu0
        %505 = vmatprep.mubr.f32.mxu0 0.0
        %506 = vmatmul.mubr.f32.gmra.mxu0 %v362
        %v507 = vpop.f32.mrf.mxu0
        %v508 = vadd.f32 %v389, %v507
        %v509 = vpop.f32.mrf.mxu0
        %510 = vmatprep.mubr.f32.mxu0 0.0
        %511 = vmatmul.mubr.f32.gmra.mxu0 %v363
        %v512 = vpop.f32.mrf.mxu0
        %v513 = vadd.f32 %v389, %v512
        %v514 = vpop.f32.mrf.mxu0
        %515 = vmatprep.mubr.f32.mxu0 0.0
        %516 = vmatmul.mubr.f32.gmra.mxu0 %v364
        %v517 = vpop.f32.mrf.mxu0
        %v518 = vadd.f32 %v389, %v517
        %v519 = vpop.f32.mrf.mxu0
        %520 = vmatprep.mubr.f32.mxu0 0.0
        %521 = vmatmul.mubr.f32.gmra.mxu0 %v365
        %v522 = vpop.f32.mrf.mxu0
        %v523 = vadd.f32 %v389, %v522
        %v524 = vpop.f32.mrf.mxu0
        %525 = vmatprep.mubr.f32.mxu0 0.0
        %526 = vmatmul.mubr.f32.gmra.mxu0 %v366
        %v527 = vpop.f32.mrf.mxu0
        %v528 = vadd.f32 %v389, %v527
        %v529 = vpop.f32.mrf.mxu0
        %530 = vmatprep.mubr.f32.mxu0 0.0
        %531 = vmatmul.mubr.f32.gmra.mxu0 %v367
        %v532 = vpop.f32.mrf.mxu0
        %v533 = vadd.f32 %v389, %v532
        %v534 = vpop.f32.mrf.mxu0
        %535 = vdwg.mxu0
        %v536 = vld [vmem:[%s349] sm:$0xff]
        %v537 = vld [vmem:[%s349 + $0x8] sm:$0xff]
        %v538 = vld [vmem:[%s349 + $0x10] sm:$0xff]
        %v539 = vld [vmem:[%s349 + $0x18] sm:$0xff]
        %v540 = vld [vmem:[%s349 + $0x20] sm:$0xff]
        %v541 = vld [vmem:[%s349 + $0x28] sm:$0xff]
        %v542 = vld [vmem:[%s349 + $0x30] sm:$0xff]
        %v543 = vld [vmem:[%s349 + $0x38] sm:$0xff]
        %v544 = vld [vmem:[%s349 + $0x40] sm:$0xff]
        %v545 = vld [vmem:[%s349 + $0x48] sm:$0xff]
        %v546 = vld [vmem:[%s349 + $0x50] sm:$0xff]
        %v547 = vld [vmem:[%s349 + $0x58] sm:$0xff]
        %v548 = vld [vmem:[%s349 + $0x60] sm:$0xff]
        %v549 = vld [vmem:[%s349 + $0x68] sm:$0xff]
        %v550 = vld [vmem:[%s349 + $0x70] sm:$0xff]
        %v551 = vld [vmem:[%s349 + $0x78] sm:$0xff]
        %v552 = vld [vmem:[%s291] sm:$0xff]
        %vm553 = vcmask 64512
        %v555 = vsel %vm553, %v536, 0
        %v558 = vsel %vm553, %v537, 0
        %v561 = vsel %vm553, %v538, 0
        %v564 = vsel %vm553, %v539, 0
        %v567 = vsel %vm553, %v540, 0
        %v570 = vsel %vm553, %v541, 0
        %v573 = vsel %vm553, %v542, 0
        %v576 = vsel %vm553, %v543, 0
        %v579 = vsel %vm553, %v544, 0
        %v582 = vsel %vm553, %v545, 0
        %v585 = vsel %vm553, %v546, 0
        %v588 = vsel %vm553, %v547, 0
        %v591 = vsel %vm553, %v548, 0
        %v594 = vsel %vm553, %v549, 0
        %v597 = vsel %vm553, %v550, 0
        %v600 = vsel %vm553, %v551, 0
        %602 = vmatprep.subr.mxu0 0.0
        %603 = vmatpush1.msra.mxu0 0.0
        %604 = vmatprep.subr.mxu0 0.0
        %605 = vmatpush1.msra.mxu0 0.0
        %606 = vmatprep.subr.mxu0 0.0
        %607 = vmatpush1.msra.mxu0 0.0
        %608 = vmatprep.subr.mxu0 0.0
        %609 = vmatpush1.msra.mxu0 0.0
        %610 = vmatprep.subr.mxu0 0.0
        %611 = vmatpush1.msra.mxu0 0.0
        %612 = vmatprep.subr.mxu0 0.0
        %613 = vmatpush1.msra.mxu0 0.0
        %614 = vmatprep.subr.mxu0 0.0
        %615 = vmatpush1.msra.mxu0 0.0
        %616 = vmatprep.subr.mxu0 0.0
        %617 = vmatpush1.msra.mxu0 0.0
        %618 = vmatprep.subr.mxu0 0.0
        %619 = vmatpush1.msra.mxu0 0.0
        %620 = vmatprep.subr.mxu0 0.0
        %621 = vmatpush1.msra.mxu0 0.0
        %622 = vmatprep.subr.mxu0 0.0
        %623 = vmatpush1.msra.mxu0 0.0
        %624 = vmatprep.subr.mxu0 0.0
        %625 = vmatpush1.msra.mxu0 0.0
        %626 = vmatprep.subr.mxu0 0.0
        %627 = vmatpush1.msra.mxu0 0.0
        %628 = vmatprep.subr.mxu0 0.0
        %629 = vmatpush1.msra.mxu0 0.0
        %630 = vmatprep.subr.mxu0 0.0
        %631 = vmatpush1.msra.mxu0 0.0
        %632 = vmatprep.subr.mxu0 0.0
        %633 = vmatpush1.msra.mxu0 %v552
        %634 = vmatprep.subr.mxu0 0.0
        %635 = vmatpush2.msra.mxu0 0.0
        %636 = vmatprep.subr.mxu0 0.0
        %637 = vmatpush2.msra.mxu0 0.0
        %638 = vmatprep.subr.mxu0 0.0
        %639 = vmatpush2.msra.mxu0 0.0
        %640 = vmatprep.subr.mxu0 0.0
        %641 = vmatpush2.msra.mxu0 0.0
        %642 = vmatprep.subr.mxu0 0.0
        %643 = vmatpush2.msra.mxu0 0.0
        %644 = vmatprep.subr.mxu0 0.0
        %645 = vmatpush2.msra.mxu0 0.0
        %646 = vmatprep.subr.mxu0 0.0
        %647 = vmatpush2.msra.mxu0 0.0
        %648 = vmatprep.subr.mxu0 0.0
        %649 = vmatpush2.msra.mxu0 0.0
        %650 = vmatprep.subr.mxu0 0.0
        %651 = vmatpush2.msra.mxu0 0.0
        %652 = vmatprep.subr.mxu0 0.0
        %653 = vmatpush2.msra.mxu0 0.0
        %654 = vmatprep.subr.mxu0 0.0
        %655 = vmatpush2.msra.mxu0 0.0
        %656 = vmatprep.subr.mxu0 0.0
        %657 = vmatpush2.msra.mxu0 0.0
        %658 = vmatprep.subr.mxu0 0.0
        %659 = vmatpush2.msra.mxu0 0.0
        %660 = vmatprep.subr.mxu0 0.0
        %661 = vmatpush2.msra.mxu0 0.0
        %662 = vmatprep.subr.mxu0 0.0
        %663 = vmatpush2.msra.mxu0 0.0
        %664 = vmatprep.subr.mxu0 0.0
        %665 = vmatpush2.msra.mxu0 0.0
        %666 = vmatprep.mubr.f32.mxu0 0.0
        %667 = vmatmul.mubr.f32.gmra.mxu0 %v555
        %v668 = vpop.f32.mrf.mxu0
        %v669 = vadd.f32 0.0, %v668
        %v670 = vpop.f32.mrf.mxu0
        %671 = vmatprep.mubr.f32.mxu0 0.0
        %672 = vmatmul.mubr.f32.gmra.mxu0 %v558
        %v673 = vpop.f32.mrf.mxu0
        %v674 = vadd.f32 0.0, %v673
        %v675 = vpop.f32.mrf.mxu0
        %676 = vmatprep.mubr.f32.mxu0 0.0
        %677 = vmatmul.mubr.f32.gmra.mxu0 %v561
        %v678 = vpop.f32.mrf.mxu0
        %v679 = vadd.f32 0.0, %v678
        %v680 = vpop.f32.mrf.mxu0
        %681 = vmatprep.mubr.f32.mxu0 0.0
        %682 = vmatmul.mubr.f32.gmra.mxu0 %v564
        %v683 = vpop.f32.mrf.mxu0
        %v684 = vadd.f32 0.0, %v683
        %v685 = vpop.f32.mrf.mxu0
        %686 = vmatprep.mubr.f32.mxu0 0.0
        %687 = vmatmul.mubr.f32.gmra.mxu0 %v567
        %v688 = vpop.f32.mrf.mxu0
        %v689 = vadd.f32 0.0, %v688
        %v690 = vpop.f32.mrf.mxu0
        %691 = vmatprep.mubr.f32.mxu0 0.0
        %692 = vmatmul.mubr.f32.gmra.mxu0 %v570
        %v693 = vpop.f32.mrf.mxu0
        %v694 = vadd.f32 0.0, %v693
        %v695 = vpop.f32.mrf.mxu0
        %696 = vmatprep.mubr.f32.mxu0 0.0
        %697 = vmatmul.mubr.f32.gmra.mxu0 %v573
        %v698 = vpop.f32.mrf.mxu0
        %v699 = vadd.f32 0.0, %v698
        %v700 = vpop.f32.mrf.mxu0
        %701 = vmatprep.mubr.f32.mxu0 0.0
        %702 = vmatmul.mubr.f32.gmra.mxu0 %v576
        %v703 = vpop.f32.mrf.mxu0
        %v704 = vadd.f32 0.0, %v703
        %v705 = vpop.f32.mrf.mxu0
        %706 = vmatprep.mubr.f32.mxu0 0.0
        %707 = vmatmul.mubr.f32.gmra.mxu0 %v579
        %v708 = vpop.f32.mrf.mxu0
        %v709 = vadd.f32 0.0, %v708
        %v710 = vpop.f32.mrf.mxu0
        %711 = vmatprep.mubr.f32.mxu0 0.0
        %712 = vmatmul.mubr.f32.gmra.mxu0 %v582
        %v713 = vpop.f32.mrf.mxu0
        %v714 = vadd.f32 0.0, %v713
        %v715 = vpop.f32.mrf.mxu0
        %716 = vmatprep.mubr.f32.mxu0 0.0
        %717 = vmatmul.mubr.f32.gmra.mxu0 %v585
        %v718 = vpop.f32.mrf.mxu0
        %v719 = vadd.f32 0.0, %v718
        %v720 = vpop.f32.mrf.mxu0
        %721 = vmatprep.mubr.f32.mxu0 0.0
        %722 = vmatmul.mubr.f32.gmra.mxu0 %v588
        %v723 = vpop.f32.mrf.mxu0
        %v724 = vadd.f32 0.0, %v723
        %v725 = vpop.f32.mrf.mxu0
        %726 = vmatprep.mubr.f32.mxu0 0.0
        %727 = vmatmul.mubr.f32.gmra.mxu0 %v591
        %v728 = vpop.f32.mrf.mxu0
        %v729 = vadd.f32 0.0, %v728
        %v730 = vpop.f32.mrf.mxu0
        %731 = vmatprep.mubr.f32.mxu0 0.0
        %732 = vmatmul.mubr.f32.gmra.mxu0 %v594
        %v733 = vpop.f32.mrf.mxu0
        %v734 = vadd.f32 0.0, %v733
        %v735 = vpop.f32.mrf.mxu0
        %736 = vmatprep.mubr.f32.mxu0 0.0
        %737 = vmatmul.mubr.f32.gmra.mxu0 %v597
        %v738 = vpop.f32.mrf.mxu0
        %v739 = vadd.f32 0.0, %v738
        %v740 = vpop.f32.mrf.mxu0
        %741 = vmatprep.mubr.f32.mxu0 0.0
        %742 = vmatmul.mubr.f32.gmra.mxu0 %v600
        %v743 = vpop.f32.mrf.mxu0
        %v744 = vadd.f32 0.0, %v743
        %v745 = vpop.f32.mrf.mxu0
        %746 = vdwg.mxu0
        %v747 = vadd.f32 %v458, %v669
        %v748 = vadd.f32 %v463, %v674
        %v749 = vadd.f32 %v468, %v679
        %v750 = vadd.f32 %v473, %v684
        %v751 = vadd.f32 %v478, %v689
        %v752 = vadd.f32 %v483, %v694
        %v753 = vadd.f32 %v488, %v699
        %v754 = vadd.f32 %v493, %v704
        %v755 = vadd.f32 %v498, %v709
        %v756 = vadd.f32 %v503, %v714
        %v757 = vadd.f32 %v508, %v719
        %v758 = vadd.f32 %v513, %v724
        %v759 = vadd.f32 %v518, %v729
        %v760 = vadd.f32 %v523, %v734
        %v761 = vadd.f32 %v528, %v739
        %v762 = vadd.f32 %v533, %v744
        %763 = vst [vmem:[%s335] sm:$0xff] %v747
        %764 = vst [vmem:[%s335 + $0x8] sm:$0xff] %v748
        %765 = vst [vmem:[%s335 + $0x10] sm:$0xff] %v749
        %766 = vst [vmem:[%s335 + $0x18] sm:$0xff] %v750
        %767 = vst [vmem:[%s335 + $0x20] sm:$0xff] %v751
        %768 = vst [vmem:[%s335 + $0x28] sm:$0xff] %v752
        %769 = vst [vmem:[%s335 + $0x30] sm:$0xff] %v753
        %770 = vst [vmem:[%s335 + $0x38] sm:$0xff] %v754
        %771 = vst [vmem:[%s335 + $0x40] sm:$0xff] %v755
        %772 = vst [vmem:[%s335 + $0x48] sm:$0xff] %v756
        %773 = vst [vmem:[%s335 + $0x50] sm:$0xff] %v757
        %774 = vst [vmem:[%s335 + $0x58] sm:$0xff] %v758
        %775 = vst [vmem:[%s335 + $0x60] sm:$0xff] %v759
        %776 = vst [vmem:[%s335 + $0x68] sm:$0xff] %v760
        %777 = vst [vmem:[%s335 + $0x70] sm:$0xff] %v761
        %778 = vst [vmem:[%s335 + $0x78] sm:$0xff] %v762
        %s779 = sand.u32 %s177, 1
        %s780 = scalar_lea.sflag [#allocation4], %s779
        %s781 = sand.u32 %s177, 1
        %s782 = smul.addr %s781, 128
        %s783 = scalar_lea.vmem [#allocation7], %s782
        // Predicated region
        $region49: #{tpu_custom_call.1} parent=39 // pred_check
          %p784 = pneg %p187
        $region50: #{tpu_custom_call.1} parent=39 // pred_check_branch
          %786 = sbr.rel (%p784) target = $region52
        $region51: #{tpu_custom_call.1} parent=39 // pred_region
          %s787 = smul.u32 16, %s30
          %s789 = ssub.s32 2048, 2048
          %790 = vsyncadd %s780, %s789
          %s791 = smul.addr %s787, 3
          %s792 = sadd.s32 %s29, %s791
          %s793 = smul.addr %s792, 128
          %s794 = scalar_lea.hbm %s5, %s793
          %s795 = sshll.u32 %s783, 4
          %s796 = int_to_ptr.vmem [resolvable:$true] %s795
          %801 = dma.vmem_to_hbm [thread:$0]  %s796, 2048, %s794, %s780, 128, 384, 8
        $region52: #{tpu_custom_call.1} parent=39 // pred_fallthru
          _
      $region40: #{tpu_custom_call.1} parent=5 // pred_fallthru
        _
      %p802 = scmp.le.s32.totalorder 2, %s20
      // Predicated region
      $region53: #{tpu_custom_call.1} parent=5 // pred_check
        %p803 = pneg %p802
      $region54: #{tpu_custom_call.1} parent=5 // pred_check_branch
        %805 = sbr.rel (%p803) target = $region56
      $region55: #{tpu_custom_call.1} parent=5 // pred_region
        %s806 = ssub.s32 %s20, 2
        // Predicated region
        $region57: #{tpu_custom_call.1} parent=55 // pred_check
          %p807 = pneg %p193
        $region58: #{tpu_custom_call.1} parent=55 // pred_check_branch
          %809 = sbr.rel (%p807) target = $region60
        $region59: #{tpu_custom_call.1} parent=55 // pred_region
          %s810 = sand.u32 %s178, 1
          %s811 = scalar_lea.sflag [#allocation4], %s810
          %s812 = sand.u32 %s178, 1
          %s813 = smul.addr %s812, 128
          %s814 = scalar_lea.vmem [#allocation7], %s813
          %815 = dma.done %s811, 2048
        $region60: #{tpu_custom_call.1} parent=55 // pred_fallthru
          _
      $region56: #{tpu_custom_call.1} parent=5 // pred_fallthru
        _
    $region6: #{tpu_custom_call.1} parent=1 // loop_footer
      %s24 = sadd.s32 1, %s20
    $region7: #{tpu_custom_call.1} parent=1 // loop_footer_branch
      %19 = sbr.rel target = $region3
    $region8: #{tpu_custom_call.1} parent=1 // loop_exit
      _
    %816 = vsyncpa [#allocation3], 1
    %s817 = scalar_lea.sflag [#allocation3], 1
    %818 = vsyncpa %s817, 1
    %819 = vsyncpa [#allocation6], 1
    %s820 = scalar_lea.sflag [#allocation6], 1
    %821 = vsyncpa %s820, 1
    %822 = vsyncpa [#allocation4], 1
    %s823 = scalar_lea.sflag [#allocation4], 1
    %824 = vsyncpa %s823, 1

</llo_original>
